<compile_context>
chip_gen: v7x
topology: tpu7x:2x2x1
jax: 0.10.0
libtpu: 0.0.40
codegen_flags: <defaults>
</compile_context>

<pallas_src>
import functools

import jax
import jax.numpy as jnp
from jax.experimental import pallas as pl
from jax.experimental.pallas import tpu as pltpu


# --------------------------------------------------------------------- budgets
def _vmem_budget_bytes():
    """Generation-aware VMEM ceiling: ~96 MiB on 128-MiB parts (v5e/v6e),
    ~48 MiB on 64-MiB parts (v7x).  Conservative fallback if the query fails."""
    cap = 64 << 20
    try:
        info = pltpu.get_tpu_info()
        cap = int(getattr(info, "vmem_capacity_bytes", cap))
    except Exception:
        pass
    return int(min((cap * 3) // 4, 96 << 20))


_VMEM_LIMIT = _vmem_budget_bytes()
# Per-step tile budget in f32 elements.  Budget ~8 tile-sized f32 buffers:
# double-buffered input + double-buffered output + ~3-4 tiles of f32
# temporaries (upcast / centered / result) inside the body.
#   v7x : ~1.5M elems (~6 MiB/tile);  v5e/v6e : ~3M elems (~12 MiB/tile)
# — both comfortably in the measured 1-4+ MiB "HBM-roofline" regime.
_MAX_TILE_ELEMS = max(1 << 18, _VMEM_LIMIT // 32)


def _sublane_align(dtype):
    itemsize = jnp.dtype(dtype).itemsize
    return max(8, 32 // max(itemsize, 1))       # f32 -> 8, bf16 -> 16, int8 -> 32


def _tile_axis(n, max_tile, align):
    """Choose (tile, num_blocks) for one tiled axis.

    `tile` is a multiple of `align` (or the whole axis).  Whenever the axis is
    large enough to split, we return >= 2 blocks so v7x's two TensorCores both
    get work (near-zero cost on single-core v5e/v6e).  Ragged last blocks are
    handled by Pallas (padded reads, masked writes)."""
    max_tile = max(align, (max_tile // align) * align)
    if n > max_tile:
        return max_tile, pl.cdiv(n, max_tile)
    if n >= 2 * align:
        half = -(-n // 2)                        # ceil(n / 2)
        half = -(-half // align) * align         # round up to alignment
        if half < n:
            return half, pl.cdiv(n, half)
    return n, 1


# --------------------------------------------------------------- channels_last
def _ln_last_kernel(x_ref, w_ref, b_ref, o_ref, *, eps):
    x = x_ref[...].astype(jnp.float32)                          # (TR, C)
    mean = jnp.mean(x, axis=-1, keepdims=True)                  # (TR, 1)
    centered = x - mean
    var = jnp.mean(centered * centered, axis=-1, keepdims=True)
    inv = jax.lax.rsqrt(var + eps)
    w = w_ref[...].astype(jnp.float32)                          # (1, C)
    b = b_ref[...].astype(jnp.float32)                          # (1, C)
    o_ref[...] = (centered * inv * w + b).astype(o_ref.dtype)


def _ln_last_packed_kernel(x_ref, seg_ref, w_ref, b_ref, o_ref, *, eps):
    # x_ref: (TR, P) with P = k*C = 128; each physical row holds k independent
    # logical rows of length C.  seg_ref is the (P, P) block-diagonal averaging
    # matrix (1/C within a segment), so one matmul on the otherwise-idle MXU
    # yields the per-segment mean broadcast back to every lane of its segment,
    # keeping all VPU work and all loads/stores lane-dense.
    x = x_ref[...].astype(jnp.float32)
    seg = seg_ref[...]                                           # (P, P) bf16

    def seg_mean(v):
        # Two-term bf16 split: exact bf16 operands + f32 accumulation keep the
        # segment means f32-accurate while using cheap single-pass bf16 MXU
        # passes (1/C is a power of two here, so `seg` is exact in bf16).
        hi = v.astype(jnp.bfloat16)
        lo = (v - hi.astype(jnp.float32)).astype(jnp.bfloat16)
        return (jnp.dot(hi, seg, preferred_element_type=jnp.float32) +
                jnp.dot(lo, seg, preferred_element_type=jnp.float32))

    mean = seg_mean(x)                                           # (TR, P)
    centered = x - mean
    var = seg_mean(centered * centered)                          # (TR, P)
    inv = jax.lax.rsqrt(var + eps)
    w = w_ref[...].astype(jnp.float32)                           # (1, P)
    b = b_ref[...].astype(jnp.float32)                           # (1, P)
    o_ref[...] = (centered * inv * w + b).astype(o_ref.dtype)


def _ln_rows(x2d, weight, bias, eps):
    """LayerNorm over the last axis of a (rows, C) array via Pallas."""
    rows, C = x2d.shape
    align = _sublane_align(x2d.dtype)
    pack = 128 // C if (0 < C < 128 and 128 % C == 0) else 1

    if pack > 1 and rows % pack == 0 and rows // pack >= 8:
        # ---------------- lane-packed path (C < 128, lane-dense) ------------
        P = pack * C                                   # == 128
        rp = rows // pack
        xp = x2d.reshape(rp, P)                        # free contiguous reshape
        seg = jnp.kron(jnp.eye(pack, dtype=jnp.float32),
                       jnp.full((C, C), 1.0 / C, dtype=jnp.float32)
                       ).astype(jnp.bfloat16)          # (P, P) block-diag 1/C
        wp = jnp.tile(weight, pack).reshape(1, P)
        bp = jnp.tile(bias, pack).reshape(1, P)

        tr, grid_rows = _tile_axis(rp, _MAX_TILE_ELEMS // P, max(align, 16))
        out = pl.pallas_call(
            functools.partial(_ln_last_packed_kernel, eps=eps),
            out_shape=jax.ShapeDtypeStruct((rp, P), x2d.dtype),
            grid_spec=pltpu.PrefetchScalarGridSpec(
                num_scalar_prefetch=0,
                grid=(grid_rows,),
                in_specs=[
                    pl.BlockSpec((tr, P), lambda i: (i, 0)),
                    pl.BlockSpec((P, P), lambda i: (0, 0)),   # constant block
                    pl.BlockSpec((1, P), lambda i: (0, 0)),   # -> not re-DMA'd
                    pl.BlockSpec((1, P), lambda i: (0, 0)),
                ],
                out_specs=pl.BlockSpec((tr, P), lambda i: (i, 0)),
            ),
            compiler_params=pltpu.CompilerParams(
                dimension_semantics=("parallel",),
                vmem_limit_bytes=_VMEM_LIMIT,
            ),
        )(xp, seg, wp, bp)
        return out.reshape(rows, C)

    # ---------------- fallback: C on lanes directly --------------------------
    tr, grid_rows = _tile_axis(rows, _MAX_TILE_ELEMS // max(C, 1), align)
    w2 = weight.reshape(1, C)
    b2 = bias.reshape(1, C)
    return pl.pallas_call(
        functools.partial(_ln_last_kernel, eps=eps),
        out_shape=jax.ShapeDtypeStruct((rows, C), x2d.dtype),
        grid_spec=pltpu.PrefetchScalarGridSpec(
            num_scalar_prefetch=0,
            grid=(grid_rows,),
            in_specs=[
                pl.BlockSpec((tr, C), lambda i: (i, 0)),
                pl.BlockSpec((1, C), lambda i: (0, 0)),
                pl.BlockSpec((1, C), lambda i: (0, 0)),
            ],
            out_specs=pl.BlockSpec((tr, C), lambda i: (i, 0)),
        ),
        compiler_params=pltpu.CompilerParams(
            dimension_semantics=("parallel",),
            vmem_limit_bytes=_VMEM_LIMIT,
        ),
    )(x2d, w2, b2)


# -------------------------------------------------------------- channels_first
def _ln_first_kernel(x_ref, w_ref, b_ref, o_ref, *, eps):
    x = x_ref[...].astype(jnp.float32)                          # (TB, C, TC)
    mean = jnp.mean(x, axis=1, keepdims=True)                   # (TB, 1, TC)
    centered = x - mean
    var = jnp.mean(centered * centered, axis=1, keepdims=True)
    inv = jax.lax.rsqrt(var + eps)
    w = w_ref[...].astype(jnp.float32)                          # (C, 1)
    b = b_ref[...].astype(jnp.float32)                          # (C, 1)
    o_ref[...] = (centered * inv * w + b).astype(o_ref.dtype)


def _ln_channels_first(x, weight, bias, eps):
    """Native NCHW LayerNorm over C: C on sublanes, H*W on lanes, no transposes."""
    B, C, H, W = x.shape
    HW = H * W
    x3 = x.reshape(B, C, HW)                        # contiguous reshape: no HBM pass

    elems = _MAX_TILE_ELEMS
    # Lane (spatial) tile: as wide as the budget allows, multiple of 128.
    tc_cap = max(128, (elems // max(C, 1)) // 128 * 128)
    if HW > tc_cap:
        tc, grid_hw = tc_cap, pl.cdiv(HW, tc_cap)
    else:
        tc, grid_hw = HW, 1
    # Batch-block: several batch elements per grid step so small-spatial inputs
    # still move multi-MiB tiles (amortizes the ~0.35us per-step overhead).
    tb = max(1, min(B, elems // max(C * tc, 1)))
    grid_b = pl.cdiv(B, tb)
    # Keep >= 2 grid programs whenever the input is splittable (v7x megacore).
    if grid_b * grid_hw == 1:
        if B >= 2:
            tb = -(-B // 2)
            grid_b = pl.cdiv(B, tb)
        elif HW >= 256:
            half = -(-HW // 2)
            tc = -(-half // 128) * 128
            grid_hw = pl.cdiv(HW, tc)

    w2 = weight.reshape(C, 1)
    b2 = bias.reshape(C, 1)

    out = pl.pallas_call(
        functools.partial(_ln_first_kernel, eps=eps),
        out_shape=jax.ShapeDtypeStruct((B, C, HW), x.dtype),
        grid_spec=pltpu.PrefetchScalarGridSpec(
            num_scalar_prefetch=0,
            grid=(grid_b, grid_hw),
            in_specs=[
                pl.BlockSpec((tb, C, tc), lambda b, j: (b, 0, j)),
                pl.BlockSpec((C, 1), lambda b, j: (0, 0)),     # constant blocks
                pl.BlockSpec((C, 1), lambda b, j: (0, 0)),     # -> not re-DMA'd
            ],
            out_specs=pl.BlockSpec((tb, C, tc), lambda b, j: (b, 0, j)),
        ),
        compiler_params=pltpu.CompilerParams(
            dimension_semantics=("parallel", "parallel"),
            vmem_limit_bytes=_VMEM_LIMIT,
        ),
    )(x3, w2, b2)
    return out.reshape(B, C, H, W)


# ----------------------------------------------------------------------- entry
def layer_norm(x, weight, bias, eps=1e-6, data_format="channels_last"):
    if data_format == "channels_last":
        C = x.shape[-1]
        assert weight.shape == (C,) and bias.shape == (C,)
        lead = x.shape[:-1]
        y = _ln_rows(x.reshape(-1, C), weight, bias, eps)
        return y.reshape(*lead, C)
    if data_format == "channels_first":
        C = x.shape[1]
        assert weight.shape == (C,) and bias.shape == (C,)
        return _ln_channels_first(x, weight, bias, eps)
    raise NotImplementedError(data_format)


# ------------------------------------------------------------------- reference
def _reference(x, weight, bias, eps, data_format):
    if data_format == "channels_last":
        u = jnp.mean(x, axis=-1, keepdims=True)
        s = jnp.mean((x - u) ** 2, axis=-1, keepdims=True)
        return (x - u) / jnp.sqrt(s + eps) * weight + bias
    u = jnp.mean(x, axis=1, keepdims=True)
    s = jnp.mean((x - u) ** 2, axis=1, keepdims=True)
    xn = (x - u) / jnp.sqrt(s + eps)
    return weight[None, :, None, None] * xn + bias[None, :, None, None]


if __name__ == "__main__":
    key = jax.random.PRNGKey(0)
    eps = 1e-6
    k1, k2, k3, k4, k5, k6, k7 = jax.random.split(key, 7)

    def check(y, ref, tol=1e-4):
        assert y.shape == ref.shape and y.dtype == ref.dtype
        assert jnp.allclose(y, ref, atol=tol, rtol=tol), float(jnp.max(jnp.abs(y - ref)))

    # --- channels_first, NCHW, B=2, C=32, 16x16 (grid split across batch) ----
    C = 32
    w = jax.random.normal(k5, (C,), dtype=jnp.float32) * 0.1 + 1.0
    b = jax.random.normal(k6, (C,), dtype=jnp.float32) * 0.1
    x_cf = jax.random.normal(k1, (2, C, 16, 16), dtype=jnp.float32)
    y_cf = jax.block_until_ready(
        layer_norm(x_cf, w, b, eps=eps, data_format="channels_first"))
    check(y_cf, _reference(x_cf, w, b, eps, "channels_first"))

    # --- channels_first, B=1: spatial split with a ragged last lane block ----
    C2 = 8
    w2 = jnp.linspace(0.5, 1.5, C2, dtype=jnp.float32)
    b2 = jnp.linspace(-0.2, 0.2, C2, dtype=jnp.float32)
    x_cf2 = jax.random.normal(k2, (1, C2, 40, 40), dtype=jnp.float32)   # HW=1600
    y_cf2 = jax.block_until_ready(
        layer_norm(x_cf2, w2, b2, eps=eps, data_format="channels_first"))
    check(y_cf2, _reference(x_cf2, w2, b2, eps, "channels_first"))

    # --- channels_first, batch-blocked (TB>1) with ragged batch block --------
    C3 = 4
    w3 = jnp.ones((C3,), jnp.float32) * 1.1
    b3 = jnp.zeros((C3,), jnp.float32) - 0.05
    x_cf3 = jax.random.normal(k7, (7, C3, 8, 8), dtype=jnp.float32)
    y_cf3 = jax.block_until_ready(
        layer_norm(x_cf3, w3, b3, eps=eps, data_format="channels_first"))
    check(y_cf3, _reference(x_cf3, w3, b3, eps, "channels_first"))

    # --- channels_last, small (fallback path, C on lanes) --------------------
    x_cl = jax.random.normal(k3, (2, 8, C), dtype=jnp.float32)
    y_cl = jax.block_until_ready(
        layer_norm(x_cl, w, b, eps=eps, data_format="channels_last"))
    check(y_cl, _reference(x_cl, w, b, eps, "channels_last"))

    # --- channels_last, lane-packed path (2100 rows, C=32 -> 525x128 view,
    #     ragged last row block) ----------------------------------------------
    x_cl2 = jax.random.normal(k4, (3, 700, C), dtype=jnp.float32)
    y_cl2 = jax.block_until_ready(
        layer_norm(x_cl2, w, b, eps=eps, data_format="channels_last"))
    check(y_cl2, _reference(x_cl2, w, b, eps, "channels_last"))

    print("KERNEL_OK")
</pallas_src>

<mosaic_0001>
module attributes {stable_mosaic.version = 11 : i64} {
  func.func @_ln_first_kernel(%arg0: i32, %arg1: i32, %arg2: memref<1x32x256xf32, #tpu.memory_space<vmem>>, %arg3: memref<32x1xf32, #tpu.memory_space<vmem>>, %arg4: memref<32x1xf32, #tpu.memory_space<vmem>>, %arg5: memref<1x32x256xf32, #tpu.memory_space<vmem>>) attributes {dimension_semantics = [#tpu.dimension_semantics<parallel>, #tpu.dimension_semantics<parallel>], iteration_bounds = array<i64: 2, 1>, scalar_prefetch = 0 : i64, scratch_operands = 0 : i64, tpu.core_type = #tpu.core_type<tc>, window_params = [{transform_indices = @transform_0, window_bounds = array<i64: 1, 32, 256>}, {pipeline_mode = #tpu.pipeline_mode<synchronous>, transform_indices = @transform_1, window_bounds = array<i64: 32, 1>}, {pipeline_mode = #tpu.pipeline_mode<synchronous>, transform_indices = @transform_2, window_bounds = array<i64: 32, 1>}, {transform_indices = @transform_3, window_bounds = array<i64: 1, 32, 256>}]} {
    %c0 = arith.constant 0 : index
    %c0_0 = arith.constant 0 : index
    %c0_1 = arith.constant 0 : index
    %0 = vector.load %arg2[%c0, %c0_0, %c0_1] : memref<1x32x256xf32, #tpu.memory_space<vmem>>, vector<1x32x256xf32>
    %cst = arith.constant dense<0.000000e+00> : vector<1x256xf32>
    %1 = vector.multi_reduction <add>, %0, %cst [1] : vector<1x32x256xf32> to vector<1x256xf32>
    %2 = vector.shape_cast %1 : vector<1x256xf32> to vector<1x1x256xf32>
    %cst_2 = arith.constant 3.200000e+01 : f32
    %3 = vector.broadcast %cst_2 : f32 to vector<1x1x256xf32>
    %4 = arith.divf %2, %3 : vector<1x1x256xf32>
    %5 = vector.broadcast %4 : vector<1x1x256xf32> to vector<1x32x256xf32>
    %6 = arith.subf %0, %5 : vector<1x32x256xf32>
    %7 = arith.mulf %6, %6 : vector<1x32x256xf32>
    %cst_3 = arith.constant dense<0.000000e+00> : vector<1x256xf32>
    %8 = vector.multi_reduction <add>, %7, %cst_3 [1] : vector<1x32x256xf32> to vector<1x256xf32>
    %9 = vector.shape_cast %8 : vector<1x256xf32> to vector<1x1x256xf32>
    %cst_4 = arith.constant 3.200000e+01 : f32
    %10 = vector.broadcast %cst_4 : f32 to vector<1x1x256xf32>
    %11 = arith.divf %9, %10 : vector<1x1x256xf32>
    %cst_5 = arith.constant 9.99999997E-7 : f32
    %12 = vector.broadcast %cst_5 : f32 to vector<1x1x256xf32>
    %13 = arith.addf %11, %12 : vector<1x1x256xf32>
    %14 = math.rsqrt %13 : vector<1x1x256xf32>
    %c0_6 = arith.constant 0 : index
    %c0_7 = arith.constant 0 : index
    %15 = vector.load %arg3[%c0_6, %c0_7] : memref<32x1xf32, #tpu.memory_space<vmem>>, vector<32x1xf32>
    %c0_8 = arith.constant 0 : index
    %c0_9 = arith.constant 0 : index
    %16 = vector.load %arg4[%c0_8, %c0_9] : memref<32x1xf32, #tpu.memory_space<vmem>>, vector<32x1xf32>
    %17 = vector.broadcast %14 : vector<1x1x256xf32> to vector<1x32x256xf32>
    %18 = arith.mulf %6, %17 : vector<1x32x256xf32>
    %19 = vector.shape_cast %15 : vector<32x1xf32> to vector<1x32x1xf32>
    %20 = vector.broadcast %19 : vector<1x32x1xf32> to vector<1x32x256xf32>
    %21 = arith.mulf %18, %20 : vector<1x32x256xf32>
    %22 = vector.shape_cast %16 : vector<32x1xf32> to vector<1x32x1xf32>
    %23 = vector.broadcast %22 : vector<1x32x1xf32> to vector<1x32x256xf32>
    %24 = arith.addf %21, %23 : vector<1x32x256xf32>
    %c0_10 = arith.constant 0 : index
    %c0_11 = arith.constant 0 : index
    %c0_12 = arith.constant 0 : index
    %25 = vector.load %arg5[%c0_10, %c0_11, %c0_12] : memref<1x32x256xf32, #tpu.memory_space<vmem>>, vector<1x32x256xf32>
    tpu.vector_store %arg5[%c0_10, %c0_11, %c0_12], %24 {strides = array<i32>} : memref<1x32x256xf32, #tpu.memory_space<vmem>>, vector<1x32x256xf32>,
    return
  }
  func.func @transform_0(%arg0: i32, %arg1: i32) -> (i32, i32, i32) {
    %c0_i32 = arith.constant 0 : i32
    %c0_i32_0 = arith.constant 0 : i32
    return %arg0, %c0_i32, %arg1 : i32, i32, i32
  }
  func.func @transform_1(%arg0: i32, %arg1: i32) -> (i32, i32) {
    %c0_i32 = arith.constant 0 : i32
    %c0_i32_0 = arith.constant 0 : i32
    %c0_i32_1 = arith.constant 0 : i32
    return %c0_i32, %c0_i32_0 : i32, i32
  }
  func.func @transform_2(%arg0: i32, %arg1: i32) -> (i32, i32) {
    %c0_i32 = arith.constant 0 : i32
    %c0_i32_0 = arith.constant 0 : i32
    %c0_i32_1 = arith.constant 0 : i32
    return %c0_i32, %c0_i32_0 : i32, i32
  }
  func.func @transform_3(%arg0: i32, %arg1: i32) -> (i32, i32, i32) {
    %c0_i32 = arith.constant 0 : i32
    %c0_i32_0 = arith.constant 0 : i32
    return %arg0, %c0_i32, %arg1 : i32, i32, i32
  }
}

</mosaic_0001>

<llo_original>
// kernel: tpu_custom_call.1
$region0: #{tpu_custom_call.1}
  #allocation0 [shape = 'u32[]', space=smem, size = 0x4, offset = 0x4, fixed_abs, tag = 'smem constant byte address 0x4 - core index']
  #allocation1 [shape = 'u32[144,128]{1,0:T(1,128)}', space=vmem, size = 0x12000, scoped, tag = 'internal scratch']
  %s0 = inlined_call_operand.hbm [shape: f32[2,32,256], index: 0, kind: input, shape index: {}]
  %s1 = inlined_call_operand.vmem [shape: f32[32,1], index: 1, kind: input, shape index: {}]
  %s2 = inlined_call_operand.vmem [shape: f32[32,1], index: 2, kind: input, shape index: {}]
  %s3 = inlined_call_operand.hbm [shape: f32[2,32,256], index: 3, kind: output, shape index: {}]
  %s4 = sld [smem:[#allocation0]]
  $region49: #{tpu_custom_call.1} parent=0
    _
  %s6 = ssub.s32 1, %s4
  %s7 = scalar_select 0, %s6, %s4
  $region1: #{tpu_custom_call.1} parent=0
    #allocation2 [shape = 'u8[65536]{0}', space=vmem, size = 0x10000, scoped, tag = 'input window, operand 0']
    #allocation3 [shape = 's32[2]{0}', space=sflag, size = 0x8, scoped, tag = 'scoped memory for tpu_custom_call.1']
    #allocation4 [shape = 's32[2]{0}', space=sflag, size = 0x8, scoped, tag = 'scoped memory for tpu_custom_call.1']
    #allocation5 [shape = 'u8[65536]{0}', space=vmem, size = 0x10000, scoped, tag = 'output window, operand 0']
    %8 = vsyncpa [#allocation3], 0
    %s9 = scalar_lea.sflag [#allocation3], 1
    %10 = vsyncpa %s9, 0
    %11 = vsyncpa [#allocation4], 0
    %s12 = scalar_lea.sflag [#allocation4], 1
    %13 = vsyncpa %s12, 0
    loop: start=0, step=1, limit=4
    $region2: #{tpu_custom_call.1} parent=1 // loop_pre_header
      _
    $region3: #{tpu_custom_call.1} parent=1 // loop_header
      %s15 = sphi 0, %s19
      %p16 = scmp.ge.s32.totalorder %s15, 4
      %s22 = sphi 0, %s34
      %s23 = sphi 0, %s30
      %s24 = sphi 0, %s22
      %s25 = sphi 0, %s23
      %s26 = sphi 0, %s24
      %s27 = sphi 0, %s25
      %s39 = sphi 0, %s41
      %s42 = sphi 0, %s39
      %s43 = sphi 0, %s42
      %s59 = sphi 0, %s43
      %s63 = sphi 0, %s63
      %s65 = sphi 0, %s63
      %s66 = sphi 0, %s65
      %s80 = sphi 0, %s66
      %s84 = sphi 0, %s84
      %s86 = sphi 0, %s84
      %s87 = sphi 0, %s86
      %s101 = sphi 0, %s87
      %s109 = sphi 0, %s111
      %s112 = sphi 0, %s109
      %s113 = sphi 0, %s112
      %s129 = sphi 0, %s113
    $region4: #{tpu_custom_call.1} parent=1 // loop_header_branch
      %18 = sbr.rel (%p16) target = $region8
    $region5: #{tpu_custom_call.1} parent=1 // loop_body
      %s20 = ssub.s32 %s15, 1
      %s21 = ssub.s32 %s15, 2
      %s28 = sadd.s32 1, %s23
      %p29 = scmp.ge.s32.totalorder %s28, 1
      %s30 = scalar_select %p29, 0, %s28
      %s31 = sadd.s32 1, %s22
      %s32 = scalar_select %p29, %s31, %s22
      %p33 = scmp.ge.s32.totalorder %s32, 2
      %s34 = scalar_select %p33, 0, %s32
      %s35 = ssub.s32 %s22, %s34
      %s36 = ssub.s32 %s23, %s30
      %s37 = sor.u32 %s35, %s36
      %p38 = scmp.eq.s32.totalorder %s37, 0
      %s40 = sadd.s32 %s39, 1
      %s41 = scalar_select %p38, %s39, %s40
      %p44 = pneg %p38
      %p45 = scmp.eq.s32.totalorder %s15, 1
      %p46 = por %p44, %p45
      %p47 = scmp.ne.s32.totalorder %s39, %s42
      %p48 = scmp.eq.s32.totalorder %s15, 0
      %p49 = por %p47, %p48
      %p50 = scmp.ne.s32.totalorder %s39, %s42
      %p51 = scmp.eq.s32.totalorder %s20, 1
      %p52 = por %p50, %p51
      %p53 = scmp.ne.s32.totalorder %s42, %s43
      %p54 = scmp.eq.s32.totalorder %s20, 0
      %p55 = por %p53, %p54
      %p56 = scmp.ne.s32.totalorder %s42, %s43
      %p57 = scmp.eq.s32.totalorder %s21, 1
      %p58 = por %p56, %p57
      %p60 = scmp.ne.s32.totalorder %s43, %s59
      %p61 = scmp.eq.s32.totalorder %s21, 0
      %p62 = por %p60, %p61
      %s64 = sadd.s32 %s63, 1
      %p67 = scmp.eq.s32.totalorder %s15, 1
      %p68 = scmp.ne.s32.totalorder %s63, %s65
      %p69 = scmp.eq.s32.totalorder %s15, 0
      %p70 = por %p68, %p69
      %p71 = scmp.ne.s32.totalorder %s63, %s65
      %p72 = scmp.eq.s32.totalorder %s20, 1
      %p73 = por %p71, %p72
      %p74 = scmp.ne.s32.totalorder %s65, %s66
      %p75 = scmp.eq.s32.totalorder %s20, 0
      %p76 = por %p74, %p75
      %p77 = scmp.ne.s32.totalorder %s65, %s66
      %p78 = scmp.eq.s32.totalorder %s21, 1
      %p79 = por %p77, %p78
      %p81 = scmp.ne.s32.totalorder %s66, %s80
      %p82 = scmp.eq.s32.totalorder %s21, 0
      %p83 = por %p81, %p82
      %s85 = sadd.s32 %s84, 1
      %p88 = scmp.eq.s32.totalorder %s15, 1
      %p89 = scmp.ne.s32.totalorder %s84, %s86
      %p90 = scmp.eq.s32.totalorder %s15, 0
      %p91 = por %p89, %p90
      %p92 = scmp.ne.s32.totalorder %s84, %s86
      %p93 = scmp.eq.s32.totalorder %s20, 1
      %p94 = por %p92, %p93
      %p95 = scmp.ne.s32.totalorder %s86, %s87
      %p96 = scmp.eq.s32.totalorder %s20, 0
      %p97 = por %p95, %p96
      %p98 = scmp.ne.s32.totalorder %s86, %s87
      %p99 = scmp.eq.s32.totalorder %s21, 1
      %p100 = por %p98, %p99
      %p102 = scmp.ne.s32.totalorder %s87, %s101
      %p103 = scmp.eq.s32.totalorder %s21, 0
      %p104 = por %p102, %p103
      %s105 = ssub.s32 %s22, %s34
      %s106 = ssub.s32 %s23, %s30
      %s107 = sor.u32 %s105, %s106
      %p108 = scmp.eq.s32.totalorder %s107, 0
      %s110 = sadd.s32 %s109, 1
      %s111 = scalar_select %p108, %s109, %s110
      %p114 = pneg %p108
      %p115 = scmp.eq.s32.totalorder %s15, 1
      %p116 = por %p114, %p115
      %p117 = scmp.ne.s32.totalorder %s109, %s112
      %p118 = scmp.eq.s32.totalorder %s15, 0
      %p119 = por %p117, %p118
      %p120 = scmp.ne.s32.totalorder %s109, %s112
      %p121 = scmp.eq.s32.totalorder %s20, 1
      %p122 = por %p120, %p121
      %p123 = scmp.ne.s32.totalorder %s112, %s113
      %p124 = scmp.eq.s32.totalorder %s20, 0
      %p125 = por %p123, %p124
      %p126 = scmp.ne.s32.totalorder %s112, %s113
      %p127 = scmp.eq.s32.totalorder %s21, 1
      %p128 = por %p126, %p127
      %p130 = scmp.ne.s32.totalorder %s113, %s129
      %p131 = scmp.eq.s32.totalorder %s21, 0
      %p132 = por %p130, %p131
      %p133 = scmp.le.s32.totalorder 1, %s15
      %p134 = scmp.lt.s32.totalorder %s15, 3
      %p135 = pnand %p133, %p134
      %p136 = pneg %p135
      // Predicated region
      $region9: #{tpu_custom_call.1} parent=5 // pred_check
        _
      $region10: #{tpu_custom_call.1} parent=5 // pred_check_branch
        %138 = sbr.rel (%p135) target = $region12
      $region11: #{tpu_custom_call.1} parent=5 // pred_region
        %s139 = ssub.s32 %s15, 1
        // Predicated region
        $region13: #{tpu_custom_call.1} parent=11 // pred_check
          %p140 = pneg %p76
        $region14: #{tpu_custom_call.1} parent=11 // pred_check_branch
          %142 = sbr.rel (%p140) target = $region16
        $region15: #{tpu_custom_call.1} parent=11 // pred_region
          _
        $region16: #{tpu_custom_call.1} parent=11 // pred_fallthru
          _
        // Predicated region
        $region17: #{tpu_custom_call.1} parent=11 // pred_check
          %p143 = pneg %p97
        $region18: #{tpu_custom_call.1} parent=11 // pred_check_branch
          %145 = sbr.rel (%p143) target = $region20
        $region19: #{tpu_custom_call.1} parent=11 // pred_region
          _
        $region20: #{tpu_custom_call.1} parent=11 // pred_fallthru
          _
      $region12: #{tpu_custom_call.1} parent=5 // pred_fallthru
        _
      %p146 = scmp.lt.s32.totalorder %s15, 2
      // Predicated region
      $region21: #{tpu_custom_call.1} parent=5 // pred_check
        %p147 = pneg %p146
      $region22: #{tpu_custom_call.1} parent=5 // pred_check_branch
        %149 = sbr.rel (%p147) target = $region24
      $region23: #{tpu_custom_call.1} parent=5 // pred_region
        // Predicated region
        $region25: #{tpu_custom_call.1} parent=23 // pred_check
          %p150 = pneg %p49
        $region26: #{tpu_custom_call.1} parent=23 // pred_check_branch
          %152 = sbr.rel (%p150) target = $region28
        $region27: #{tpu_custom_call.1} parent=23 // pred_region
          %s153 = sand.u32 %s39, 1
          %s154 = scalar_lea.sflag [#allocation3], %s153
          %s155 = sand.u32 %s39, 1
          %s156 = smul.addr %s155, 64
          %s157 = scalar_lea.vmem [#allocation2], %s156
          %s158 = smul.u32 2, %s23
          %s160 = ssub.s32 1024, 1024
          %161 = vsyncadd %s154, %s160
          %s162 = smul.addr %s22, 8
          %s163 = sadd.s32 %s158, %s162
          %s164 = smul.addr %s163, 128
          %s165 = scalar_lea.hbm %s0, %s164
          %s166 = sshll.u32 %s157, 4
          %s167 = int_to_ptr.vmem [resolvable:$true] %s166
          %172 = dma.hbm_to_vmem [thread:$0]  %s165, 1024, %s167, %s154, 256, 256, 16
        $region28: #{tpu_custom_call.1} parent=23 // pred_fallthru
          _
      $region24: #{tpu_custom_call.1} parent=5 // pred_fallthru
        _
      %p173 = scmp.le.s32.totalorder 1, %s15
      %p174 = scmp.lt.s32.totalorder %s15, 3
      %p175 = pnand %p173, %p174
      %p176 = pneg %p175
      // Predicated region
      $region29: #{tpu_custom_call.1} parent=5 // pred_check
        _
      $region30: #{tpu_custom_call.1} parent=5 // pred_check_branch
        %178 = sbr.rel (%p175) target = $region32
      $region31: #{tpu_custom_call.1} parent=5 // pred_region
        %s179 = ssub.s32 %s15, 1
        %s180 = sand.u32 %s42, 1
        %s181 = scalar_lea.sflag [#allocation3], %s180
        %s182 = sand.u32 %s42, 1
        %s183 = smul.addr %s182, 64
        %s184 = scalar_lea.vmem [#allocation2], %s183
        // Predicated region
        $region33: #{tpu_custom_call.1} parent=31 // pred_check
          %p185 = pneg %p55
        $region34: #{tpu_custom_call.1} parent=31 // pred_check_branch
          %187 = sbr.rel (%p185) target = $region36
        $region35: #{tpu_custom_call.1} parent=31 // pred_region
          %188 = dma.done %s181, 1024
        $region36: #{tpu_custom_call.1} parent=31 // pred_fallthru
          _
        %s189 = sand.u32 %s42, 1
        %s190 = scalar_lea.sflag [#allocation3], %s189
        %s191 = sand.u32 %s42, 1
        %s192 = smul.addr %s191, 64
        %s193 = scalar_lea.vmem [#allocation2], %s192
        %p194 = pneg %p55
        %p195 = pneg %p52
        %p196 = pneg %p76
        %p197 = pneg %p73
        %p198 = pneg %p97
        %p199 = pneg %p94
        %p200 = pneg %p125
        %p201 = pneg %p122
        %s202 = sand.u32 %s112, 1
        %s203 = scalar_lea.sflag [#allocation4], %s202
        %s204 = sand.u32 %s112, 1
        %s205 = smul.addr %s204, 64
        %s206 = scalar_lea.vmem [#allocation5], %s205
        %s207 = smul.u32 2, %s25
        %s208 = smul.u32 2, %s25
        %v209 = vld [vmem:[%s184] sm:$0xff]
        %v210 = vld [vmem:[%s184 + $0x8] sm:$0xff]
        %v211 = vld [vmem:[%s184 + $0x10] sm:$0xff]
        %v212 = vld [vmem:[%s184 + $0x18] sm:$0xff]
        %v213 = vld [vmem:[%s184 + $0x20] sm:$0xff]
        %v214 = vld [vmem:[%s184 + $0x28] sm:$0xff]
        %v215 = vld [vmem:[%s184 + $0x30] sm:$0xff]
        %v216 = vld [vmem:[%s184 + $0x38] sm:$0xff]
        %v217 = vadd.f32 %v209, %v211
        %v218 = vadd.f32 %v217, %v213
        %v219 = vadd.f32 %v218, %v215
        %v220 = vrot.slane %v219, 4
        %v221 = vadd.f32 %v219, %v220
        %v222 = vrot.slane %v221, 2
        %v223 = vadd.f32 %v221, %v222
        %v224 = vrot.slane %v223, 1
        %v225 = vadd.f32 %v223, %v224
        %v226 = vadd.f32 %v210, %v212
        %v227 = vadd.f32 %v226, %v214
        %v228 = vadd.f32 %v227, %v216
        %v229 = vrot.slane %v228, 4
        %v230 = vadd.f32 %v228, %v229
        %v231 = vrot.slane %v230, 2
        %v232 = vadd.f32 %v230, %v231
        %v233 = vrot.slane %v232, 1
        %v234 = vadd.f32 %v232, %v233
        %v235 = vrcp.pop 32.0
        %v236 = vmul.f32 %v225, %v235
        %v237 = vmul.f32 %v234, %v235
        %v238 = vsub.f32 %v209, %v236
        %v239 = vsub.f32 %v210, %v237
        %v240 = vsub.f32 %v211, %v236
        %v241 = vsub.f32 %v212, %v237
        %v242 = vsub.f32 %v213, %v236
        %v243 = vsub.f32 %v214, %v237
        %v244 = vsub.f32 %v215, %v236
        %v245 = vsub.f32 %v216, %v237
        %v246 = vmul.f32 %v238, %v238
        %v247 = vmul.f32 %v239, %v239
        %v248 = vmul.f32 %v240, %v240
        %v249 = vmul.f32 %v241, %v241
        %v250 = vmul.f32 %v242, %v242
        %v251 = vmul.f32 %v243, %v243
        %v252 = vmul.f32 %v244, %v244
        %v253 = vmul.f32 %v245, %v245
        %v254 = vadd.f32 %v246, %v248
        %v255 = vadd.f32 %v254, %v250
        %v256 = vadd.f32 %v255, %v252
        %v257 = vrot.slane %v256, 4
        %v258 = vadd.f32 %v256, %v257
        %v259 = vrot.slane %v258, 2
        %v260 = vadd.f32 %v258, %v259
        %v261 = vrot.slane %v260, 1
        %v262 = vadd.f32 %v260, %v261
        %v263 = vadd.f32 %v247, %v249
        %v264 = vadd.f32 %v263, %v251
        %v265 = vadd.f32 %v264, %v253
        %v266 = vrot.slane %v265, 4
        %v267 = vadd.f32 %v265, %v266
        %v268 = vrot.slane %v267, 2
        %v269 = vadd.f32 %v267, %v268
        %v270 = vrot.slane %v269, 1
        %v271 = vadd.f32 %v269, %v270
        %v272 = vmul.f32 %v262, %v235
        %v273 = vmul.f32 %v271, %v235
        %v274 = vadd.f32 %v272, 1e-06
        %v275 = vadd.f32 %v273, 1e-06
        %v276 = vrsqrt.pop %v274
        %v277 = vrsqrt.pop %v275
        %v278 = vld [vmem:[%s1] sm:$0xff]
        %v279 = vld [vmem:[%s1 + $0x8] sm:$0xff]
        %v280 = vld [vmem:[%s1 + $0x10] sm:$0xff]
        %v281 = vld [vmem:[%s1 + $0x18] sm:$0xff]
        %v282 = vld [vmem:[%s2] sm:$0xff]
        %v283 = vld [vmem:[%s2 + $0x8] sm:$0xff]
        %v284 = vld [vmem:[%s2 + $0x10] sm:$0xff]
        %v285 = vld [vmem:[%s2 + $0x18] sm:$0xff]
        %v286 = vmul.f32 %v238, %v276
        %v287 = vmul.f32 %v239, %v277
        %v288 = vmul.f32 %v240, %v276
        %v289 = vmul.f32 %v241, %v277
        %v290 = vmul.f32 %v242, %v276
        %v291 = vmul.f32 %v243, %v277
        %v292 = vmul.f32 %v244, %v276
        %v293 = vmul.f32 %v245, %v277
        %295 = vset.pattern.permute.xlu0 0
        %296 = vperm.xlu0 %295, %v278
        %v297 = vpop.permute.xlu0 %296
        %300 = vset.pattern.permute.xlu0 0
        %301 = vperm.xlu0 %300, %v279
        %v302 = vpop.permute.xlu0 %301
        %305 = vset.pattern.permute.xlu0 0
        %306 = vperm.xlu0 %305, %v280
        %v307 = vpop.permute.xlu0 %306
        %310 = vset.pattern.permute.xlu0 0
        %311 = vperm.xlu0 %310, %v281
        %v312 = vpop.permute.xlu0 %311
        %v314 = vmul.f32 %v286, %v297
        %v315 = vmul.f32 %v287, %v297
        %v316 = vmul.f32 %v288, %v302
        %v317 = vmul.f32 %v289, %v302
        %v318 = vmul.f32 %v290, %v307
        %v319 = vmul.f32 %v291, %v307
        %v320 = vmul.f32 %v292, %v312
        %v321 = vmul.f32 %v293, %v312
        %323 = vset.pattern.permute.xlu0 0
        %324 = vperm.xlu0 %323, %v282
        %v325 = vpop.permute.xlu0 %324
        %328 = vset.pattern.permute.xlu0 0
        %329 = vperm.xlu0 %328, %v283
        %v330 = vpop.permute.xlu0 %329
        %333 = vset.pattern.permute.xlu0 0
        %334 = vperm.xlu0 %333, %v284
        %v335 = vpop.permute.xlu0 %334
        %338 = vset.pattern.permute.xlu0 0
        %339 = vperm.xlu0 %338, %v285
        %v340 = vpop.permute.xlu0 %339
        %v342 = vadd.f32 %v314, %v325
        %v343 = vadd.f32 %v315, %v325
        %v344 = vadd.f32 %v316, %v330
        %v345 = vadd.f32 %v317, %v330
        %v346 = vadd.f32 %v318, %v335
        %v347 = vadd.f32 %v319, %v335
        %v348 = vadd.f32 %v320, %v340
        %v349 = vadd.f32 %v321, %v340
        %350 = vst [vmem:[%s206] sm:$0xff] %v342
        %351 = vst [vmem:[%s206 + $0x8] sm:$0xff] %v343
        %352 = vst [vmem:[%s206 + $0x10] sm:$0xff] %v344
        %353 = vst [vmem:[%s206 + $0x18] sm:$0xff] %v345
        %354 = vst [vmem:[%s206 + $0x20] sm:$0xff] %v346
        %355 = vst [vmem:[%s206 + $0x28] sm:$0xff] %v347
        %356 = vst [vmem:[%s206 + $0x30] sm:$0xff] %v348
        %357 = vst [vmem:[%s206 + $0x38] sm:$0xff] %v349
        %s358 = sand.u32 %s112, 1
        %s359 = scalar_lea.sflag [#allocation4], %s358
        %s360 = sand.u32 %s112, 1
        %s361 = smul.addr %s360, 64
        %s362 = scalar_lea.vmem [#allocation5], %s361
        // Predicated region
        $region37: #{tpu_custom_call.1} parent=31 // pred_check
          %p363 = pneg %p122
        $region38: #{tpu_custom_call.1} parent=31 // pred_check_branch
          %365 = sbr.rel (%p363) target = $region40
        $region39: #{tpu_custom_call.1} parent=31 // pred_region
          %s366 = smul.u32 2, %s25
          %s368 = ssub.s32 1024, 1024
          %369 = vsyncadd %s359, %s368
          %s370 = smul.addr %s24, 8
          %s371 = sadd.s32 %s366, %s370
          %s372 = smul.addr %s371, 128
          %s373 = scalar_lea.hbm %s3, %s372
          %s374 = sshll.u32 %s362, 4
          %s375 = int_to_ptr.vmem [resolvable:$true] %s374
          %380 = dma.vmem_to_hbm [thread:$0]  %s375, 1024, %s373, %s359, 256, 256, 16
        $region40: #{tpu_custom_call.1} parent=31 // pred_fallthru
          _
      $region32: #{tpu_custom_call.1} parent=5 // pred_fallthru
        _
      %p381 = scmp.le.s32.totalorder 2, %s15
      // Predicated region
      $region41: #{tpu_custom_call.1} parent=5 // pred_check
        %p382 = pneg %p381
      $region42: #{tpu_custom_call.1} parent=5 // pred_check_branch
        %384 = sbr.rel (%p382) target = $region44
      $region43: #{tpu_custom_call.1} parent=5 // pred_region
        %s385 = ssub.s32 %s15, 2
        // Predicated region
        $region45: #{tpu_custom_call.1} parent=43 // pred_check
          %p386 = pneg %p128
        $region46: #{tpu_custom_call.1} parent=43 // pred_check_branch
          %388 = sbr.rel (%p386) target = $region48
        $region47: #{tpu_custom_call.1} parent=43 // pred_region
          %s389 = sand.u32 %s113, 1
          %s390 = scalar_lea.sflag [#allocation4], %s389
          %s391 = sand.u32 %s113, 1
          %s392 = smul.addr %s391, 64
          %s393 = scalar_lea.vmem [#allocation5], %s392
          %394 = dma.done %s390, 1024
        $region48: #{tpu_custom_call.1} parent=43 // pred_fallthru
          _
      $region44: #{tpu_custom_call.1} parent=5 // pred_fallthru
        _
    $region6: #{tpu_custom_call.1} parent=1 // loop_footer
      %s19 = sadd.s32 1, %s15
    $region7: #{tpu_custom_call.1} parent=1 // loop_footer_branch
      %14 = sbr.rel target = $region3
    $region8: #{tpu_custom_call.1} parent=1 // loop_exit
      _
    %395 = vsyncpa [#allocation3], 1
    %s396 = scalar_lea.sflag [#allocation3], 1
    %397 = vsyncpa %s396, 1
    %398 = vsyncpa [#allocation4], 1
    %s399 = scalar_lea.sflag [#allocation4], 1
    %400 = vsyncpa %s399, 1

</llo_original>
